<compile_context>
chip_gen: v7x
topology: tpu7x:2x2x1
jax: 0.10.0
libtpu: 0.0.40
codegen_flags: <defaults>
</compile_context>

<pallas_src>
import functools

import jax
import jax.numpy as jnp
from jax.experimental import pallas as pl
from jax.experimental.pallas import tpu as pltpu

HIDDEN = 128        # hidden_size of ResidualNet
NUM_RES = 4         # num_final_fcs
OUT_DIM = 2         # hid2out: Linear(128, 2)
OUT_PAD = 128       # lane-dense padded output width
LEAKY_SLOPE = 0.01  # F.leaky_relu default negative_slope


def _round_up(x, m):
    return (x + m - 1) // m * m


def dpm_kernel(x1_ref, x2_ref, w_in_a_ref, w_in_b_ref, b_in_ref,
               w_res_ref, b_res_ref, w_out_ref, b_out_ref, o_ref,
               *, mm_dtype):
    # x1: [TILE_B, D1], x2: [TILE_B, D2]  (concat is fused into two matmuls)
    x1 = x1_ref[...].astype(mm_dtype)
    x2 = x2_ref[...].astype(mm_dtype)

    # hidden = leaky_relu(input2hid(cat(x1, x2)))    -- f32 accumulate on MXU
    h = (jnp.dot(x1, w_in_a_ref[...], preferred_element_type=jnp.float32)
         + jnp.dot(x2, w_in_b_ref[...], preferred_element_type=jnp.float32)
         + b_in_ref[...])
    h = jnp.where(h > 0, h, LEAKY_SLOPE * h)

    # residual tower (statically unrolled, NUM_RES == 4)
    residual = h
    for i in range(NUM_RES):
        r = jnp.dot(h.astype(mm_dtype), w_res_ref[i],
                    preferred_element_type=jnp.float32) + b_res_ref[i]
        residual = jnp.maximum(r, 0.0)   # relu
        h = h + residual

    # ResidualNet returns the last `residual` (not `hidden`) — match that.
    active = jnp.tanh(residual)

    # Dropout(p=0) is identity; hid2out linear (zero-padded to 128 lanes).
    o_ref[...] = (jnp.dot(active.astype(mm_dtype), w_out_ref[...],
                          preferred_element_type=jnp.float32)
                  + b_out_ref[...])


def destination_prediction(sptm_out, traj_semantic, params, *,
                           tile_b=1024, use_bf16=True):
    """Pallas forward of Destination_Prediction_Moudle.  Returns [B, 2] f32."""
    B, D1 = sptm_out.shape
    _, D2 = traj_semantic.shape
    sptm_out = sptm_out.astype(jnp.float32)
    traj_semantic = traj_semantic.astype(jnp.float32)

    # Batch tiling: tile_b multiple of 8, capped by the (rounded-up) batch.
    tile_b = max(8, min(tile_b, _round_up(B, 8)))
    tile_b = _round_up(tile_b, 8)
    Bp = _round_up(B, tile_b)
    if Bp != B:
        pad = Bp - B
        sptm_out = jnp.pad(sptm_out, ((0, pad), (0, 0)))
        traj_semantic = jnp.pad(traj_semantic, ((0, pad), (0, 0)))

    mm_dtype = jnp.bfloat16 if use_bf16 else jnp.float32

    # Split input weight so the concat never materializes in HBM.
    w_in = params["w_in"].astype(jnp.float32)
    w_in_a = w_in[:D1].astype(mm_dtype)
    w_in_b = w_in[D1:].astype(mm_dtype)
    b_in = params["b_in"].astype(jnp.float32)
    w_res = params["w_res"].astype(mm_dtype)
    b_res = params["b_res"].astype(jnp.float32)

    # Zero-pad the output head to 128 lanes (lane-dense, unmasked stores).
    w_out_pad = jnp.zeros((HIDDEN, OUT_PAD), jnp.float32)
    w_out_pad = w_out_pad.at[:, :OUT_DIM].set(params["w_out"].astype(jnp.float32))
    w_out_pad = w_out_pad.astype(mm_dtype)
    b_out_pad = jnp.zeros((1, OUT_PAD), jnp.float32)
    b_out_pad = b_out_pad.at[:, :OUT_DIM].set(params["b_out"].astype(jnp.float32))

    grid = (Bp // tile_b,)
    kernel = functools.partial(dpm_kernel, mm_dtype=mm_dtype)

    out = pl.pallas_call(
        kernel,
        out_shape=jax.ShapeDtypeStruct((Bp, OUT_PAD), jnp.float32),
        grid_spec=pltpu.PrefetchScalarGridSpec(
            num_scalar_prefetch=0,
            grid=grid,
            in_specs=[
                # streamed batch tiles
                pl.BlockSpec((tile_b, D1), lambda i: (i, 0)),
                pl.BlockSpec((tile_b, D2), lambda i: (i, 0)),
                # VMEM-resident parameters (constant block index → DMA'd once)
                pl.BlockSpec((D1, HIDDEN), lambda i: (0, 0)),
                pl.BlockSpec((D2, HIDDEN), lambda i: (0, 0)),
                pl.BlockSpec((1, HIDDEN), lambda i: (0, 0)),
                pl.BlockSpec((NUM_RES, HIDDEN, HIDDEN), lambda i: (0, 0, 0)),
                pl.BlockSpec((NUM_RES, 1, HIDDEN), lambda i: (0, 0, 0)),
                pl.BlockSpec((HIDDEN, OUT_PAD), lambda i: (0, 0)),
                pl.BlockSpec((1, OUT_PAD), lambda i: (0, 0)),
            ],
            out_specs=pl.BlockSpec((tile_b, OUT_PAD), lambda i: (i, 0)),
        ),
        compiler_params=pltpu.CompilerParams(
            dimension_semantics=("parallel",)),
    )(sptm_out, traj_semantic, w_in_a, w_in_b, b_in, w_res, b_res,
      w_out_pad, b_out_pad)

    # drop batch padding and the zero-padded output lanes
    return out[:B, :OUT_DIM]


def init_params(key, input_size):
    """Deterministic parameter init (uniform ~ torch Linear default ranges).
    Weights stored as [in, out] (pre-transposed vs. torch's [out, in])."""
    ks = jax.random.split(key, 6)
    k_in = 1.0 / jnp.sqrt(jnp.float32(input_size))
    k_h = 1.0 / jnp.sqrt(jnp.float32(HIDDEN))
    params = {
        # input2hid: Linear(input_size, 128)
        "w_in": jax.random.uniform(ks[0], (input_size, HIDDEN), jnp.float32, -k_in, k_in),
        "b_in": jax.random.uniform(ks[1], (1, HIDDEN), jnp.float32, -k_in, k_in),
        # residuals: 4 x Linear(128, 128) — stacked [4, in, out]
        "w_res": jax.random.uniform(ks[2], (NUM_RES, HIDDEN, HIDDEN), jnp.float32, -k_h, k_h),
        "b_res": jax.random.uniform(ks[3], (NUM_RES, 1, HIDDEN), jnp.float32, -k_h, k_h),
        # hid2out: Linear(128, 2)
        "w_out": jax.random.uniform(ks[4], (HIDDEN, OUT_DIM), jnp.float32, -k_h, k_h),
        "b_out": jax.random.uniform(ks[5], (1, OUT_DIM), jnp.float32, -k_h, k_h),
    }
    return params


def reference_forward(sptm_out, traj_semantic, params, *, use_bf16=False):
    """Pure-JAX reference matching the PyTorch forward (optionally with the
    same bf16-operand casts as the kernel, f32 accumulation)."""
    mm = (lambda a, b: jnp.dot(a.astype(jnp.bfloat16), b.astype(jnp.bfloat16),
                               preferred_element_type=jnp.float32)) if use_bf16 \
        else (lambda a, b: jnp.dot(a, b, preferred_element_type=jnp.float32))
    x = jnp.concatenate([sptm_out, traj_semantic], axis=1).astype(jnp.float32)
    h = mm(x, params["w_in"]) + params["b_in"]
    h = jnp.where(h > 0, h, LEAKY_SLOPE * h)
    residual = h
    for i in range(NUM_RES):
        r = mm(h, params["w_res"][i]) + params["b_res"][i]
        residual = jnp.maximum(r, 0.0)
        h = h + residual
    active = jnp.tanh(residual)
    return mm(active, params["w_out"]) + params["b_out"]


if __name__ == "__main__":
    key = jax.random.PRNGKey(0)
    k_p, k_a, k_b, k_c, k_d = jax.random.split(key, 5)

    B, D1, D2 = 8, 64, 64          # input_size = D1 + D2 = 128
    sptm_out = jax.random.normal(k_a, (B, D1), jnp.float32)
    traj_semantic = jax.random.normal(k_b, (B, D2), jnp.float32)
    params = init_params(k_p, D1 + D2)

    # 1) exact path (f32 matmuls) vs f32 reference
    res_f32 = destination_prediction(sptm_out, traj_semantic, params, use_bf16=False)
    res_f32 = jax.block_until_ready(res_f32)
    ref_f32 = reference_forward(sptm_out, traj_semantic, params)
    assert res_f32.shape == (B, OUT_DIM)
    assert jnp.allclose(res_f32, ref_f32, atol=1e-4, rtol=1e-4), "f32 kernel mismatch"

    # 2) fast path (bf16 MXU operands, f32 accumulate)
    res_bf16 = destination_prediction(sptm_out, traj_semantic, params, use_bf16=True)
    res_bf16 = jax.block_until_ready(res_bf16)
    ref_bf16 = reference_forward(sptm_out, traj_semantic, params, use_bf16=True)
    assert jnp.allclose(res_bf16, ref_bf16, atol=2e-3, rtol=2e-3), "bf16 kernel mismatch"
    assert jnp.allclose(res_bf16, ref_f32, atol=5e-2, rtol=5e-2), "bf16 vs f32 drift too large"

    # 3) multi-tile grid + batch padding exercise (B not a multiple of tile_b)
    B2 = 300
    s2 = jax.random.normal(k_c, (B2, D1), jnp.float32)
    t2 = jax.random.normal(k_d, (B2, D2), jnp.float32)
    res2 = destination_prediction(s2, t2, params, tile_b=128, use_bf16=True)
    res2 = jax.block_until_ready(res2)
    ref2 = reference_forward(s2, t2, params)
    assert res2.shape == (B2, OUT_DIM)
    assert jnp.allclose(res2, ref2, atol=5e-2, rtol=5e-2), "gridded kernel mismatch"

    print("KERNEL_OK")
</pallas_src>

<mosaic_0001>
module attributes {stable_mosaic.version = 11 : i64} {
  func.func @dpm_kernel(%arg0: i32, %arg1: memref<8x64xf32, #tpu.memory_space<vmem>>, %arg2: memref<8x64xf32, #tpu.memory_space<vmem>>, %arg3: memref<64x128xf32, #tpu.memory_space<vmem>>, %arg4: memref<64x128xf32, #tpu.memory_space<vmem>>, %arg5: memref<1x128xf32, #tpu.memory_space<vmem>>, %arg6: memref<4x128x128xf32, #tpu.memory_space<vmem>>, %arg7: memref<4x1x128xf32, #tpu.memory_space<vmem>>, %arg8: memref<128x128xf32, #tpu.memory_space<vmem>>, %arg9: memref<1x128xf32, #tpu.memory_space<vmem>>, %arg10: memref<8x128xf32, #tpu.memory_space<vmem>>) attributes {dimension_semantics = [#tpu.dimension_semantics<parallel>], iteration_bounds = array<i64: 1>, scalar_prefetch = 0 : i64, scratch_operands = 0 : i64, tpu.core_type = #tpu.core_type<tc>, window_params = [{transform_indices = @transform_0, window_bounds = array<i64: 8, 64>}, {transform_indices = @transform_1, window_bounds = array<i64: 8, 64>}, {pipeline_mode = #tpu.pipeline_mode<synchronous>, transform_indices = @transform_2, window_bounds = array<i64: 64, 128>}, {pipeline_mode = #tpu.pipeline_mode<synchronous>, transform_indices = @transform_3, window_bounds = array<i64: 64, 128>}, {pipeline_mode = #tpu.pipeline_mode<synchronous>, transform_indices = @transform_4, window_bounds = array<i64: 1, 128>}, {pipeline_mode = #tpu.pipeline_mode<synchronous>, transform_indices = @transform_5, window_bounds = array<i64: 4, 128, 128>}, {pipeline_mode = #tpu.pipeline_mode<synchronous>, transform_indices = @transform_6, window_bounds = array<i64: 4, 1, 128>}, {pipeline_mode = #tpu.pipeline_mode<synchronous>, transform_indices = @transform_7, window_bounds = array<i64: 128, 128>}, {pipeline_mode = #tpu.pipeline_mode<synchronous>, transform_indices = @transform_8, window_bounds = array<i64: 1, 128>}, {transform_indices = @transform_9, window_bounds = array<i64: 8, 128>}]} {
    %c0 = arith.constant 0 : index
    %c0_0 = arith.constant 0 : index
    %0 = vector.load %arg1[%c0, %c0_0] : memref<8x64xf32, #tpu.memory_space<vmem>>, vector<8x64xf32>
    %c0_1 = arith.constant 0 : index
    %c0_2 = arith.constant 0 : index
    %1 = vector.load %arg2[%c0_1, %c0_2] : memref<8x64xf32, #tpu.memory_space<vmem>>, vector<8x64xf32>
    %c0_3 = arith.constant 0 : index
    %c0_4 = arith.constant 0 : index
    %2 = vector.load %arg3[%c0_3, %c0_4] : memref<64x128xf32, #tpu.memory_space<vmem>>, vector<64x128xf32>
    %cst = arith.constant dense<0.000000e+00> : vector<8x128xf32>
    %3 = tpu.matmul %0, %2, %cst {dimension_numbers = #tpu.dot_dimension_numbers<[1], [0], [0], [1], [0, 0, 1, 1], [], []>} : vector<8x64xf32>, vector<64x128xf32>, vector<8x128xf32> -> vector<8x128xf32>
    %c0_5 = arith.constant 0 : index
    %c0_6 = arith.constant 0 : index
    %4 = vector.load %arg4[%c0_5, %c0_6] : memref<64x128xf32, #tpu.memory_space<vmem>>, vector<64x128xf32>
    %cst_7 = arith.constant dense<0.000000e+00> : vector<8x128xf32>
    %5 = tpu.matmul %1, %4, %cst_7 {dimension_numbers = #tpu.dot_dimension_numbers<[1], [0], [0], [1], [0, 0, 1, 1], [], []>} : vector<8x64xf32>, vector<64x128xf32>, vector<8x128xf32> -> vector<8x128xf32>
    %6 = arith.addf %3, %5 : vector<8x128xf32>
    %c0_8 = arith.constant 0 : index
    %c0_9 = arith.constant 0 : index
    %7 = vector.load %arg5[%c0_8, %c0_9] : memref<1x128xf32, #tpu.memory_space<vmem>>, vector<1x128xf32>
    %8 = vector.broadcast %7 : vector<1x128xf32> to vector<8x128xf32>
    %9 = arith.addf %6, %8 : vector<8x128xf32>
    %cst_10 = arith.constant 0.000000e+00 : f32
    %10 = vector.broadcast %cst_10 : f32 to vector<8x128xf32>
    %11 = arith.cmpf ogt, %9, %10 : vector<8x128xf32>
    %cst_11 = arith.constant 0.00999999977 : f32
    %12 = vector.broadcast %cst_11 : f32 to vector<8x128xf32>
    %13 = arith.mulf %12, %9 : vector<8x128xf32>
    %14 = arith.select %11, %9, %13 : vector<8x128xi1>, vector<8x128xf32>
    %c0_12 = arith.constant 0 : index
    %c0_13 = arith.constant 0 : index
    %c0_14 = arith.constant 0 : index
    %15 = vector.load %arg6[%c0_12, %c0_13, %c0_14] : memref<4x128x128xf32, #tpu.memory_space<vmem>>, vector<1x128x128xf32>
    %16 = vector.shape_cast %15 : vector<1x128x128xf32> to vector<128x128xf32>
    %cst_15 = arith.constant dense<0.000000e+00> : vector<8x128xf32>
    %17 = tpu.matmul %14, %16, %cst_15 {dimension_numbers = #tpu.dot_dimension_numbers<[1], [0], [0], [1], [0, 0, 1, 1], [], []>} : vector<8x128xf32>, vector<128x128xf32>, vector<8x128xf32> -> vector<8x128xf32>
    %c0_16 = arith.constant 0 : index
    %c0_17 = arith.constant 0 : index
    %c0_18 = arith.constant 0 : index
    %18 = vector.load %arg7[%c0_16, %c0_17, %c0_18] : memref<4x1x128xf32, #tpu.memory_space<vmem>>, vector<1x1x128xf32>
    %19 = vector.shape_cast %18 : vector<1x1x128xf32> to vector<1x128xf32>
    %20 = vector.broadcast %19 : vector<1x128xf32> to vector<8x128xf32>
    %21 = arith.addf %17, %20 : vector<8x128xf32>
    %cst_19 = arith.constant 0.000000e+00 : f32
    %22 = vector.broadcast %cst_19 : f32 to vector<8x128xf32>
    %23 = arith.maximumf %21, %22 : vector<8x128xf32>
    %24 = arith.addf %14, %23 : vector<8x128xf32>
    %c1 = arith.constant 1 : index
    %c0_20 = arith.constant 0 : index
    %c0_21 = arith.constant 0 : index
    %25 = vector.load %arg6[%c1, %c0_20, %c0_21] : memref<4x128x128xf32, #tpu.memory_space<vmem>>, vector<1x128x128xf32>
    %26 = vector.shape_cast %25 : vector<1x128x128xf32> to vector<128x128xf32>
    %cst_22 = arith.constant dense<0.000000e+00> : vector<8x128xf32>
    %27 = tpu.matmul %24, %26, %cst_22 {dimension_numbers = #tpu.dot_dimension_numbers<[1], [0], [0], [1], [0, 0, 1, 1], [], []>} : vector<8x128xf32>, vector<128x128xf32>, vector<8x128xf32> -> vector<8x128xf32>
    %c1_23 = arith.constant 1 : index
    %c0_24 = arith.constant 0 : index
    %c0_25 = arith.constant 0 : index
    %28 = vector.load %arg7[%c1_23, %c0_24, %c0_25] : memref<4x1x128xf32, #tpu.memory_space<vmem>>, vector<1x1x128xf32>
    %29 = vector.shape_cast %28 : vector<1x1x128xf32> to vector<1x128xf32>
    %30 = vector.broadcast %29 : vector<1x128xf32> to vector<8x128xf32>
    %31 = arith.addf %27, %30 : vector<8x128xf32>
    %cst_26 = arith.constant 0.000000e+00 : f32
    %32 = vector.broadcast %cst_26 : f32 to vector<8x128xf32>
    %33 = arith.maximumf %31, %32 : vector<8x128xf32>
    %34 = arith.addf %24, %33 : vector<8x128xf32>
    %c2 = arith.constant 2 : index
    %c0_27 = arith.constant 0 : index
    %c0_28 = arith.constant 0 : index
    %35 = vector.load %arg6[%c2, %c0_27, %c0_28] : memref<4x128x128xf32, #tpu.memory_space<vmem>>, vector<1x128x128xf32>
    %36 = vector.shape_cast %35 : vector<1x128x128xf32> to vector<128x128xf32>
    %cst_29 = arith.constant dense<0.000000e+00> : vector<8x128xf32>
    %37 = tpu.matmul %34, %36, %cst_29 {dimension_numbers = #tpu.dot_dimension_numbers<[1], [0], [0], [1], [0, 0, 1, 1], [], []>} : vector<8x128xf32>, vector<128x128xf32>, vector<8x128xf32> -> vector<8x128xf32>
    %c2_30 = arith.constant 2 : index
    %c0_31 = arith.constant 0 : index
    %c0_32 = arith.constant 0 : index
    %38 = vector.load %arg7[%c2_30, %c0_31, %c0_32] : memref<4x1x128xf32, #tpu.memory_space<vmem>>, vector<1x1x128xf32>
    %39 = vector.shape_cast %38 : vector<1x1x128xf32> to vector<1x128xf32>
    %40 = vector.broadcast %39 : vector<1x128xf32> to vector<8x128xf32>
    %41 = arith.addf %37, %40 : vector<8x128xf32>
    %cst_33 = arith.constant 0.000000e+00 : f32
    %42 = vector.broadcast %cst_33 : f32 to vector<8x128xf32>
    %43 = arith.maximumf %41, %42 : vector<8x128xf32>
    %44 = arith.addf %34, %43 : vector<8x128xf32>
    %c3 = arith.constant 3 : index
    %c0_34 = arith.constant 0 : index
    %c0_35 = arith.constant 0 : index
    %45 = vector.load %arg6[%c3, %c0_34, %c0_35] : memref<4x128x128xf32, #tpu.memory_space<vmem>>, vector<1x128x128xf32>
    %46 = vector.shape_cast %45 : vector<1x128x128xf32> to vector<128x128xf32>
    %cst_36 = arith.constant dense<0.000000e+00> : vector<8x128xf32>
    %47 = tpu.matmul %44, %46, %cst_36 {dimension_numbers = #tpu.dot_dimension_numbers<[1], [0], [0], [1], [0, 0, 1, 1], [], []>} : vector<8x128xf32>, vector<128x128xf32>, vector<8x128xf32> -> vector<8x128xf32>
    %c3_37 = arith.constant 3 : index
    %c0_38 = arith.constant 0 : index
    %c0_39 = arith.constant 0 : index
    %48 = vector.load %arg7[%c3_37, %c0_38, %c0_39] : memref<4x1x128xf32, #tpu.memory_space<vmem>>, vector<1x1x128xf32>
    %49 = vector.shape_cast %48 : vector<1x1x128xf32> to vector<1x128xf32>
    %50 = vector.broadcast %49 : vector<1x128xf32> to vector<8x128xf32>
    %51 = arith.addf %47, %50 : vector<8x128xf32>
    %cst_40 = arith.constant 0.000000e+00 : f32
    %52 = vector.broadcast %cst_40 : f32 to vector<8x128xf32>
    %53 = arith.maximumf %51, %52 : vector<8x128xf32>
    %54 = math.tanh %53 : vector<8x128xf32>
    %c0_41 = arith.constant 0 : index
    %c0_42 = arith.constant 0 : index
    %55 = vector.load %arg8[%c0_41, %c0_42] : memref<128x128xf32, #tpu.memory_space<vmem>>, vector<128x128xf32>
    %cst_43 = arith.constant dense<0.000000e+00> : vector<8x128xf32>
    %56 = tpu.matmul %54, %55, %cst_43 {dimension_numbers = #tpu.dot_dimension_numbers<[1], [0], [0], [1], [0, 0, 1, 1], [], []>} : vector<8x128xf32>, vector<128x128xf32>, vector<8x128xf32> -> vector<8x128xf32>
    %c0_44 = arith.constant 0 : index
    %c0_45 = arith.constant 0 : index
    %57 = vector.load %arg9[%c0_44, %c0_45] : memref<1x128xf32, #tpu.memory_space<vmem>>, vector<1x128xf32>
    %58 = vector.broadcast %57 : vector<1x128xf32> to vector<8x128xf32>
    %59 = arith.addf %56, %58 : vector<8x128xf32>
    %c0_46 = arith.constant 0 : index
    %c0_47 = arith.constant 0 : index
    %60 = vector.load %arg10[%c0_46, %c0_47] : memref<8x128xf32, #tpu.memory_space<vmem>>, vector<8x128xf32>
    tpu.vector_store %arg10[%c0_46, %c0_47], %59 {strides = array<i32>} : memref<8x128xf32, #tpu.memory_space<vmem>>, vector<8x128xf32>,
    return
  }
  func.func @transform_0(%arg0: i32) -> (i32, i32) {
    %c0_i32 = arith.constant 0 : i32
    %c0_i32_0 = arith.constant 0 : i32
    return %arg0, %c0_i32 : i32, i32
  }
  func.func @transform_1(%arg0: i32) -> (i32, i32) {
    %c0_i32 = arith.constant 0 : i32
    %c0_i32_0 = arith.constant 0 : i32
    return %arg0, %c0_i32 : i32, i32
  }
  func.func @transform_2(%arg0: i32) -> (i32, i32) {
    %c0_i32 = arith.constant 0 : i32
    %c0_i32_0 = arith.constant 0 : i32
    %c0_i32_1 = arith.constant 0 : i32
    return %c0_i32, %c0_i32_0 : i32, i32
  }
  func.func @transform_3(%arg0: i32) -> (i32, i32) {
    %c0_i32 = arith.constant 0 : i32
    %c0_i32_0 = arith.constant 0 : i32
    %c0_i32_1 = arith.constant 0 : i32
    return %c0_i32, %c0_i32_0 : i32, i32
  }
  func.func @transform_4(%arg0: i32) -> (i32, i32) {
    %c0_i32 = arith.constant 0 : i32
    %c0_i32_0 = arith.constant 0 : i32
    %c0_i32_1 = arith.constant 0 : i32
    return %c0_i32, %c0_i32_0 : i32, i32
  }
  func.func @transform_5(%arg0: i32) -> (i32, i32, i32) {
    %c0_i32 = arith.constant 0 : i32
    %c0_i32_0 = arith.constant 0 : i32
    %c0_i32_1 = arith.constant 0 : i32
    %c0_i32_2 = arith.constant 0 : i32
    return %c0_i32, %c0_i32_0, %c0_i32_1 : i32, i32, i32
  }
  func.func @transform_6(%arg0: i32) -> (i32, i32, i32) {
    %c0_i32 = arith.constant 0 : i32
    %c0_i32_0 = arith.constant 0 : i32
    %c0_i32_1 = arith.constant 0 : i32
    %c0_i32_2 = arith.constant 0 : i32
    return %c0_i32, %c0_i32_0, %c0_i32_1 : i32, i32, i32
  }
  func.func @transform_7(%arg0: i32) -> (i32, i32) {
    %c0_i32 = arith.constant 0 : i32
    %c0_i32_0 = arith.constant 0 : i32
    %c0_i32_1 = arith.constant 0 : i32
    return %c0_i32, %c0_i32_0 : i32, i32
  }
  func.func @transform_8(%arg0: i32) -> (i32, i32) {
    %c0_i32 = arith.constant 0 : i32
    %c0_i32_0 = arith.constant 0 : i32
    %c0_i32_1 = arith.constant 0 : i32
    return %c0_i32, %c0_i32_0 : i32, i32
  }
  func.func @transform_9(%arg0: i32) -> (i32, i32) {
    %c0_i32 = arith.constant 0 : i32
    %c0_i32_0 = arith.constant 0 : i32
    return %arg0, %c0_i32 : i32, i32
  }
}

</mosaic_0001>

<llo_original>
// kernel: tpu_custom_call.1
$region0: #{tpu_custom_call.1}
  #allocation0 [shape = 'u32[]', space=smem, size = 0x4, offset = 0x4, fixed_abs, tag = 'smem constant byte address 0x4 - core index']
  #allocation1 [shape = 'u32[144,128]{1,0:T(1,128)}', space=vmem, size = 0x12000, scoped, tag = 'internal scratch']
  %s0 = inlined_call_operand.hbm [shape: f32[8,64], index: 0, kind: input, shape index: {}]
  %s1 = inlined_call_operand.hbm [shape: f32[8,64], index: 1, kind: input, shape index: {}]
  %s2 = inlined_call_operand.hbm [shape: f32[64,128], index: 2, kind: input, shape index: {}]
  %s3 = inlined_call_operand.hbm [shape: f32[64,128], index: 3, kind: input, shape index: {}]
  %s4 = inlined_call_operand.vmem [shape: f32[1,128], index: 4, kind: input, shape index: {}]
  %s5 = inlined_call_operand.hbm [shape: f32[4,128,128], index: 5, kind: input, shape index: {}]
  %s6 = inlined_call_operand.vmem [shape: f32[4,1,128], index: 6, kind: input, shape index: {}]
  %s7 = inlined_call_operand.hbm [shape: f32[128,128], index: 7, kind: input, shape index: {}]
  %s8 = inlined_call_operand.vmem [shape: f32[1,128], index: 8, kind: input, shape index: {}]
  %s9 = inlined_call_operand.hbm [shape: f32[8,128], index: 9, kind: output, shape index: {}]
  %s10 = sld [smem:[#allocation0]]
  $region70: #{tpu_custom_call.1} parent=0
    _
  %s12 = ssub.s32 1, %s10
  %s13 = scalar_select 0, %s12, %s10
  $region1: #{tpu_custom_call.1} parent=0
    #allocation2 [shape = 'u8[4096]{0}', space=vmem, size = 0x1000, scoped, tag = 'input window, operand 0, single buffered']
    #allocation3 [shape = 's32[1]{0}', space=sflag, size = 0x4, scoped, tag = 'scoped memory for tpu_custom_call.1']
    #allocation4 [shape = 's32[1]{0}', space=sflag, size = 0x4, scoped, tag = 'scoped memory for tpu_custom_call.1']
    #allocation5 [shape = 'u8[4096]{0}', space=vmem, size = 0x1000, scoped, tag = 'input window, operand 1, single buffered']
    #allocation6 [shape = 's32[1]{0}', space=sflag, size = 0x4, scoped, tag = 'scoped memory for tpu_custom_call.1']
    #allocation7 [shape = 'u8[32768]{0}', space=vmem, size = 0x8000, scoped, tag = 'input window, operand 2, single buffered']
    #allocation8 [shape = 'u8[32768]{0}', space=vmem, size = 0x8000, scoped, tag = 'input window, operand 3, single buffered']
    #allocation9 [shape = 's32[1]{0}', space=sflag, size = 0x4, scoped, tag = 'scoped memory for tpu_custom_call.1']
    #allocation10 [shape = 'u8[262144]{0}', space=vmem, size = 0x40000, scoped, tag = 'input window, operand 5, single buffered']
    #allocation11 [shape = 'u8[65536]{0}', space=vmem, size = 0x10000, scoped, tag = 'input window, operand 7, single buffered']
    #allocation12 [shape = 's32[1]{0}', space=sflag, size = 0x4, scoped, tag = 'scoped memory for tpu_custom_call.1']
    #allocation13 [shape = 'u8[4096]{0}', space=vmem, size = 0x1000, scoped, tag = 'output window, operand 0, single buffered']
    %14 = vsyncpa [#allocation3], 0
    %15 = vsyncpa [#allocation6], 0
    %16 = vsyncpa [#allocation9], 0
    %17 = vsyncpa [#allocation12], 0
    %18 = vsyncpa [#allocation4], 0
    // Predicated region
    $region2: #{tpu_custom_call.1} parent=1 // pred_check
      _
    $region3: #{tpu_custom_call.1} parent=1 // pred_check_branch
      %20 = sbr.rel (0) target = $region5
    $region4: #{tpu_custom_call.1} parent=1 // pred_region
      %s22 = ssub.s32 128, 128
      %23 = vsyncadd [#allocation3], %s22
      %s25 = sshll.u32 [#allocation2], 4
      %s26 = int_to_ptr.vmem [resolvable:$true] %s25
      %28 = dma.hbm_to_vmem [thread:$0]  %s0, 128, %s26, [#allocation3]
    $region5: #{tpu_custom_call.1} parent=1 // pred_fallthru
      _
    // Predicated region
    $region6: #{tpu_custom_call.1} parent=1 // pred_check
      _
    $region7: #{tpu_custom_call.1} parent=1 // pred_check_branch
      %30 = sbr.rel (0) target = $region9
    $region8: #{tpu_custom_call.1} parent=1 // pred_region
      %s32 = ssub.s32 128, 128
      %33 = vsyncadd [#allocation6], %s32
      %s35 = sshll.u32 [#allocation5], 4
      %s36 = int_to_ptr.vmem [resolvable:$true] %s35
      %38 = dma.hbm_to_vmem [thread:$0]  %s1, 128, %s36, [#allocation6]
    $region9: #{tpu_custom_call.1} parent=1 // pred_fallthru
      _
    // Predicated region
    $region10: #{tpu_custom_call.1} parent=1 // pred_check
      _
    $region11: #{tpu_custom_call.1} parent=1 // pred_check_branch
      %40 = sbr.rel (0) target = $region13
    $region12: #{tpu_custom_call.1} parent=1 // pred_region
      %s42 = ssub.s32 1024, 1024
      %43 = vsyncadd [#allocation6], %s42
      %s44 = sshll.u32 [#allocation7], 4
      %s45 = int_to_ptr.vmem [resolvable:$true] %s44
      %50 = dma.hbm_to_vmem [thread:$0]  %s2, 1024, %s45, [#allocation6], 128, 128, 8
    $region13: #{tpu_custom_call.1} parent=1 // pred_fallthru
      _
    // Predicated region
    $region14: #{tpu_custom_call.1} parent=1 // pred_check
      _
    $region15: #{tpu_custom_call.1} parent=1 // pred_check_branch
      %52 = sbr.rel (0) target = $region17
    $region16: #{tpu_custom_call.1} parent=1 // pred_region
      %s54 = ssub.s32 1024, 1024
      %55 = vsyncadd [#allocation9], %s54
      %s56 = sshll.u32 [#allocation8], 4
      %s57 = int_to_ptr.vmem [resolvable:$true] %s56
      %62 = dma.hbm_to_vmem [thread:$0]  %s3, 1024, %s57, [#allocation9], 128, 128, 8
    $region17: #{tpu_custom_call.1} parent=1 // pred_fallthru
      _
    // Predicated region
    $region18: #{tpu_custom_call.1} parent=1 // pred_check
      _
    $region19: #{tpu_custom_call.1} parent=1 // pred_check_branch
      %64 = sbr.rel (0) target = $region21
    $region20: #{tpu_custom_call.1} parent=1 // pred_region
      _
    $region21: #{tpu_custom_call.1} parent=1 // pred_fallthru
      _
    // Predicated region
    $region22: #{tpu_custom_call.1} parent=1 // pred_check
      _
    $region23: #{tpu_custom_call.1} parent=1 // pred_check_branch
      %66 = sbr.rel (0) target = $region25
    $region24: #{tpu_custom_call.1} parent=1 // pred_region
      %s68 = ssub.s32 8192, 8192
      %69 = vsyncadd [#allocation9], %s68
      %s70 = sshll.u32 [#allocation10], 4
      %s71 = int_to_ptr.vmem [resolvable:$true] %s70
      %76 = dma.hbm_to_vmem [thread:$0]  %s5, 8192, %s71, [#allocation9], 128, 128, 8
    $region25: #{tpu_custom_call.1} parent=1 // pred_fallthru
      _
    // Predicated region
    $region26: #{tpu_custom_call.1} parent=1 // pred_check
      _
    $region27: #{tpu_custom_call.1} parent=1 // pred_check_branch
      %78 = sbr.rel (0) target = $region29
    $region28: #{tpu_custom_call.1} parent=1 // pred_region
      _
    $region29: #{tpu_custom_call.1} parent=1 // pred_fallthru
      _
    // Predicated region
    $region30: #{tpu_custom_call.1} parent=1 // pred_check
      _
    $region31: #{tpu_custom_call.1} parent=1 // pred_check_branch
      %80 = sbr.rel (0) target = $region33
    $region32: #{tpu_custom_call.1} parent=1 // pred_region
      %s82 = ssub.s32 2048, 2048
      %83 = vsyncadd [#allocation12], %s82
      %s84 = sshll.u32 [#allocation11], 4
      %s85 = int_to_ptr.vmem [resolvable:$true] %s84
      %90 = dma.hbm_to_vmem [thread:$0]  %s7, 2048, %s85, [#allocation12], 128, 128, 8
    $region33: #{tpu_custom_call.1} parent=1 // pred_fallthru
      _
    // Predicated region
    $region34: #{tpu_custom_call.1} parent=1 // pred_check
      _
    $region35: #{tpu_custom_call.1} parent=1 // pred_check_branch
      %92 = sbr.rel (0) target = $region37
    $region36: #{tpu_custom_call.1} parent=1 // pred_region
      _
    $region37: #{tpu_custom_call.1} parent=1 // pred_fallthru
      _
    // Predicated region
    $region38: #{tpu_custom_call.1} parent=1 // pred_check
      _
    $region39: #{tpu_custom_call.1} parent=1 // pred_check_branch
      %94 = sbr.rel (0) target = $region41
    $region40: #{tpu_custom_call.1} parent=1 // pred_region
      %95 = dma.done [#allocation3], 128
    $region41: #{tpu_custom_call.1} parent=1 // pred_fallthru
      _
    // Predicated region
    $region42: #{tpu_custom_call.1} parent=1 // pred_check
      _
    $region43: #{tpu_custom_call.1} parent=1 // pred_check_branch
      %97 = sbr.rel (0) target = $region45
    $region44: #{tpu_custom_call.1} parent=1 // pred_region
      %98 = dma.done [#allocation6], 128
    $region45: #{tpu_custom_call.1} parent=1 // pred_fallthru
      _
    // Predicated region
    $region46: #{tpu_custom_call.1} parent=1 // pred_check
      _
    $region47: #{tpu_custom_call.1} parent=1 // pred_check_branch
      %100 = sbr.rel (0) target = $region49
    $region48: #{tpu_custom_call.1} parent=1 // pred_region
      %101 = dma.done [#allocation6], 1024
    $region49: #{tpu_custom_call.1} parent=1 // pred_fallthru
      _
    // Predicated region
    $region50: #{tpu_custom_call.1} parent=1 // pred_check
      _
    $region51: #{tpu_custom_call.1} parent=1 // pred_check_branch
      %103 = sbr.rel (0) target = $region53
    $region52: #{tpu_custom_call.1} parent=1 // pred_region
      %104 = dma.done [#allocation9], 1024
    $region53: #{tpu_custom_call.1} parent=1 // pred_fallthru
      _
    // Predicated region
    $region54: #{tpu_custom_call.1} parent=1 // pred_check
      _
    $region55: #{tpu_custom_call.1} parent=1 // pred_check_branch
      %106 = sbr.rel (0) target = $region57
    $region56: #{tpu_custom_call.1} parent=1 // pred_region
      %107 = dma.done [#allocation9], 8192
    $region57: #{tpu_custom_call.1} parent=1 // pred_fallthru
      _
    // Predicated region
    $region58: #{tpu_custom_call.1} parent=1 // pred_check
      _
    $region59: #{tpu_custom_call.1} parent=1 // pred_check_branch
      %109 = sbr.rel (0) target = $region61
    $region60: #{tpu_custom_call.1} parent=1 // pred_region
      %110 = dma.done [#allocation12], 2048
    $region61: #{tpu_custom_call.1} parent=1 // pred_fallthru
      _
    %v111 = vld [vmem:[#allocation2] sm:$0xff]
    %v112 = vld [vmem:[#allocation5] sm:$0xff]
    %v113 = vld [vmem:[#allocation7] sm:$0xff]
    %v114 = vld [vmem:[#allocation7 + $0x8] sm:$0xff]
    %v115 = vld [vmem:[#allocation7 + $0x10] sm:$0xff]
    %v116 = vld [vmem:[#allocation7 + $0x18] sm:$0xff]
    %v117 = vld [vmem:[#allocation7 + $0x20] sm:$0xff]
    %v118 = vld [vmem:[#allocation7 + $0x28] sm:$0xff]
    %v119 = vld [vmem:[#allocation7 + $0x30] sm:$0xff]
    %v120 = vld [vmem:[#allocation7 + $0x38] sm:$0xff]
    %v121 = vld [vmem:[#allocation8] sm:$0xff]
    %v122 = vld [vmem:[#allocation8 + $0x8] sm:$0xff]
    %v123 = vld [vmem:[#allocation8 + $0x10] sm:$0xff]
    %v124 = vld [vmem:[#allocation8 + $0x18] sm:$0xff]
    %v125 = vld [vmem:[#allocation8 + $0x20] sm:$0xff]
    %v126 = vld [vmem:[#allocation8 + $0x28] sm:$0xff]
    %v127 = vld [vmem:[#allocation8 + $0x30] sm:$0xff]
    %v128 = vld [vmem:[#allocation8 + $0x38] sm:$0xff]
    %vm129 = vcmask 523264
    %v131 = vsel %vm129, %v112, 0
    %133 = vmatprep.subr.mxu0 0.0
    %134 = vmatpush1.msra.mxu0 %v121
    %135 = vmatprep.subr.mxu0 0.0
    %136 = vmatpush1.msra.mxu0 %v122
    %137 = vmatprep.subr.mxu0 0.0
    %138 = vmatpush1.msra.mxu0 %v123
    %139 = vmatprep.subr.mxu0 0.0
    %140 = vmatpush1.msra.mxu0 %v124
    %141 = vmatprep.subr.mxu0 0.0
    %142 = vmatpush1.msra.mxu0 %v125
    %143 = vmatprep.subr.mxu0 0.0
    %144 = vmatpush1.msra.mxu0 %v126
    %145 = vmatprep.subr.mxu0 0.0
    %146 = vmatpush1.msra.mxu0 %v127
    %147 = vmatprep.subr.mxu0 0.0
    %148 = vmatpush1.msra.mxu0 %v128
    %149 = vmatprep.subr.mxu0 0.0
    %150 = vmatpush1.msra.mxu0 0.0
    %151 = vmatprep.subr.mxu0 0.0
    %152 = vmatpush1.msra.mxu0 0.0
    %153 = vmatprep.subr.mxu0 0.0
    %154 = vmatpush1.msra.mxu0 0.0
    %155 = vmatprep.subr.mxu0 0.0
    %156 = vmatpush1.msra.mxu0 0.0
    %157 = vmatprep.subr.mxu0 0.0
    %158 = vmatpush1.msra.mxu0 0.0
    %159 = vmatprep.subr.mxu0 0.0
    %160 = vmatpush1.msra.mxu0 0.0
    %161 = vmatprep.subr.mxu0 0.0
    %162 = vmatpush1.msra.mxu0 0.0
    %163 = vmatprep.subr.mxu0 0.0
    %164 = vmatpush1.msra.mxu0 0.0
    %165 = vmatprep.subr.mxu0 0.0
    %166 = vmatpush1.msra.mxu0 0.0
    %167 = vmatprep.subr.mxu0 0.0
    %168 = vmatpush1.msra.mxu0 0.0
    %169 = vmatprep.subr.mxu0 0.0
    %170 = vmatpush1.msra.mxu0 0.0
    %171 = vmatprep.subr.mxu0 0.0
    %172 = vmatpush1.msra.mxu0 0.0
    %173 = vmatprep.subr.mxu0 0.0
    %174 = vmatpush1.msra.mxu0 0.0
    %175 = vmatprep.subr.mxu0 0.0
    %176 = vmatpush1.msra.mxu0 0.0
    %177 = vmatprep.subr.mxu0 0.0
    %178 = vmatpush1.msra.mxu0 0.0
    %179 = vmatprep.subr.mxu0 0.0
    %180 = vmatpush1.msra.mxu0 0.0
    %181 = vmatprep.subr.mxu0 0.0
    %182 = vmatpush1.msra.mxu0 0.0
    %183 = vmatprep.subr.mxu0 0.0
    %184 = vmatpush1.msra.mxu0 0.0
    %185 = vmatprep.subr.mxu0 0.0
    %186 = vmatpush1.msra.mxu0 0.0
    %187 = vmatprep.subr.mxu0 0.0
    %188 = vmatpush1.msra.mxu0 0.0
    %189 = vmatprep.subr.mxu0 0.0
    %190 = vmatpush1.msra.mxu0 0.0
    %191 = vmatprep.subr.mxu0 0.0
    %192 = vmatpush1.msra.mxu0 0.0
    %193 = vmatprep.subr.mxu0 0.0
    %194 = vmatpush1.msra.mxu0 0.0
    %195 = vmatprep.subr.mxu0 0.0
    %196 = vmatpush1.msra.mxu0 0.0
    %197 = vmatprep.mubr.f32.mxu0 0.0
    %198 = vmatmul.mubr.f32.gmra.mrb[0].mxu0 %v131
    %v199 = vpop.f32.mrb[0].mxu0
    %v200 = vadd.f32 0.0, %v199
    %v201 = vpop.f32.mrb[0].mxu0
    %202 = vdwg.mxu0
    %v204 = vsel %vm129, %v111, 0
    %206 = vmatprep.subr.mxu0 0.0
    %207 = vmatpush1.msra.mxu0 %v113
    %208 = vmatprep.subr.mxu0 0.0
    %209 = vmatpush1.msra.mxu0 %v114
    %210 = vmatprep.subr.mxu0 0.0
    %211 = vmatpush1.msra.mxu0 %v115
    %212 = vmatprep.subr.mxu0 0.0
    %213 = vmatpush1.msra.mxu0 %v116
    %214 = vmatprep.subr.mxu0 0.0
    %215 = vmatpush1.msra.mxu0 %v117
    %216 = vmatprep.subr.mxu0 0.0
    %217 = vmatpush1.msra.mxu0 %v118
    %218 = vmatprep.subr.mxu0 0.0
    %219 = vmatpush1.msra.mxu0 %v119
    %220 = vmatprep.subr.mxu0 0.0
    %221 = vmatpush1.msra.mxu0 %v120
    %222 = vmatprep.subr.mxu0 0.0
    %223 = vmatpush1.msra.mxu0 0.0
    %224 = vmatprep.subr.mxu0 0.0
    %225 = vmatpush1.msra.mxu0 0.0
    %226 = vmatprep.subr.mxu0 0.0
    %227 = vmatpush1.msra.mxu0 0.0
    %228 = vmatprep.subr.mxu0 0.0
    %229 = vmatpush1.msra.mxu0 0.0
    %230 = vmatprep.subr.mxu0 0.0
    %231 = vmatpush1.msra.mxu0 0.0
    %232 = vmatprep.subr.mxu0 0.0
    %233 = vmatpush1.msra.mxu0 0.0
    %234 = vmatprep.subr.mxu0 0.0
    %235 = vmatpush1.msra.mxu0 0.0
    %236 = vmatprep.subr.mxu0 0.0
    %237 = vmatpush1.msra.mxu0 0.0
    %238 = vmatprep.subr.mxu0 0.0
    %239 = vmatpush1.msra.mxu0 0.0
    %240 = vmatprep.subr.mxu0 0.0
    %241 = vmatpush1.msra.mxu0 0.0
    %242 = vmatprep.subr.mxu0 0.0
    %243 = vmatpush1.msra.mxu0 0.0
    %244 = vmatprep.subr.mxu0 0.0
    %245 = vmatpush1.msra.mxu0 0.0
    %246 = vmatprep.subr.mxu0 0.0
    %247 = vmatpush1.msra.mxu0 0.0
    %248 = vmatprep.subr.mxu0 0.0
    %249 = vmatpush1.msra.mxu0 0.0
    %250 = vmatprep.subr.mxu0 0.0
    %251 = vmatpush1.msra.mxu0 0.0
    %252 = vmatprep.subr.mxu0 0.0
    %253 = vmatpush1.msra.mxu0 0.0
    %254 = vmatprep.subr.mxu0 0.0
    %255 = vmatpush1.msra.mxu0 0.0
    %256 = vmatprep.subr.mxu0 0.0
    %257 = vmatpush1.msra.mxu0 0.0
    %258 = vmatprep.subr.mxu0 0.0
    %259 = vmatpush1.msra.mxu0 0.0
    %260 = vmatprep.subr.mxu0 0.0
    %261 = vmatpush1.msra.mxu0 0.0
    %262 = vmatprep.subr.mxu0 0.0
    %263 = vmatpush1.msra.mxu0 0.0
    %264 = vmatprep.subr.mxu0 0.0
    %265 = vmatpush1.msra.mxu0 0.0
    %266 = vmatprep.subr.mxu0 0.0
    %267 = vmatpush1.msra.mxu0 0.0
    %268 = vmatprep.subr.mxu0 0.0
    %269 = vmatpush1.msra.mxu0 0.0
    %270 = vmatprep.mubr.f32.mxu0 0.0
    %271 = vmatmul.mubr.f32.gmra.mrb[0].mxu0 %v204
    %v272 = vpop.f32.mrb[0].mxu0
    %v273 = vadd.f32 %v200, %v272
    %v274 = vpop.f32.mrb[0].mxu0
    %275 = vdwg.mxu0
    %v276 = vld [vmem:[%s4] sm:$0x1]
    %v278 = vlaneseq
    %v279 = vshrl.u32 %v278, 7
    %v280 = vsub.s32 0, %v279
    %v281 = vrot.slane %v276, %v280
    %v283 = vadd.f32 %v273, %v281
    %vm284 = vcmp.gt.f32.partialorder %v283, 0.0
    %v285 = vmul.f32 %v283, 0.01
    %v286 = vsel %vm284, %v283, %v285
    %v287 = vld [vmem:[#allocation10] sm:$0xff]
    %v288 = vld [vmem:[#allocation10 + $0x8] sm:$0xff]
    %v289 = vld [vmem:[#allocation10 + $0x10] sm:$0xff]
    %v290 = vld [vmem:[#allocation10 + $0x18] sm:$0xff]
    %v291 = vld [vmem:[#allocation10 + $0x20] sm:$0xff]
    %v292 = vld [vmem:[#allocation10 + $0x28] sm:$0xff]
    %v293 = vld [vmem:[#allocation10 + $0x30] sm:$0xff]
    %v294 = vld [vmem:[#allocation10 + $0x38] sm:$0xff]
    %v295 = vld [vmem:[#allocation10 + $0x40] sm:$0xff]
    %v296 = vld [vmem:[#allocation10 + $0x48] sm:$0xff]
    %v297 = vld [vmem:[#allocation10 + $0x50] sm:$0xff]
    %v298 = vld [vmem:[#allocation10 + $0x58] sm:$0xff]
    %v299 = vld [vmem:[#allocation10 + $0x60] sm:$0xff]
    %v300 = vld [vmem:[#allocation10 + $0x68] sm:$0xff]
    %v301 = vld [vmem:[#allocation10 + $0x70] sm:$0xff]
    %v302 = vld [vmem:[#allocation10 + $0x78] sm:$0xff]
    %v303 = vld [vmem:[%s6] sm:$0x1]
    %v305 = vlaneseq
    %v306 = vshrl.u32 %v305, 7
    %v307 = vsub.s32 0, %v306
    %v308 = vrot.slane %v303, %v307
    %310 = vmatprep.subr.mxu0 0.0
    %311 = vmatpush1.msra.mxu0 %v287
    %312 = vmatprep.subr.mxu0 0.0
    %313 = vmatpush1.msra.mxu0 %v288
    %314 = vmatprep.subr.mxu0 0.0
    %315 = vmatpush1.msra.mxu0 %v289
    %316 = vmatprep.subr.mxu0 0.0
    %317 = vmatpush1.msra.mxu0 %v290
    %318 = vmatprep.subr.mxu0 0.0
    %319 = vmatpush1.msra.mxu0 %v291
    %320 = vmatprep.subr.mxu0 0.0
    %321 = vmatpush1.msra.mxu0 %v292
    %322 = vmatprep.subr.mxu0 0.0
    %323 = vmatpush1.msra.mxu0 %v293
    %324 = vmatprep.subr.mxu0 0.0
    %325 = vmatpush1.msra.mxu0 %v294
    %326 = vmatprep.subr.mxu0 0.0
    %327 = vmatpush1.msra.mxu0 %v295
    %328 = vmatprep.subr.mxu0 0.0
    %329 = vmatpush1.msra.mxu0 %v296
    %330 = vmatprep.subr.mxu0 0.0
    %331 = vmatpush1.msra.mxu0 %v297
    %332 = vmatprep.subr.mxu0 0.0
    %333 = vmatpush1.msra.mxu0 %v298
    %334 = vmatprep.subr.mxu0 0.0
    %335 = vmatpush1.msra.mxu0 %v299
    %336 = vmatprep.subr.mxu0 0.0
    %337 = vmatpush1.msra.mxu0 %v300
    %338 = vmatprep.subr.mxu0 0.0
    %339 = vmatpush1.msra.mxu0 %v301
    %340 = vmatprep.subr.mxu0 0.0
    %341 = vmatpush1.msra.mxu0 %v302
    %342 = vmatprep.subr.mxu0 0.0
    %343 = vmatpush1.msra.mxu0 0.0
    %344 = vmatprep.subr.mxu0 0.0
    %345 = vmatpush1.msra.mxu0 0.0
    %346 = vmatprep.subr.mxu0 0.0
    %347 = vmatpush1.msra.mxu0 0.0
    %348 = vmatprep.subr.mxu0 0.0
    %349 = vmatpush1.msra.mxu0 0.0
    %350 = vmatprep.subr.mxu0 0.0
    %351 = vmatpush1.msra.mxu0 0.0
    %352 = vmatprep.subr.mxu0 0.0
    %353 = vmatpush1.msra.mxu0 0.0
    %354 = vmatprep.subr.mxu0 0.0
    %355 = vmatpush1.msra.mxu0 0.0
    %356 = vmatprep.subr.mxu0 0.0
    %357 = vmatpush1.msra.mxu0 0.0
    %358 = vmatprep.subr.mxu0 0.0
    %359 = vmatpush1.msra.mxu0 0.0
    %360 = vmatprep.subr.mxu0 0.0
    %361 = vmatpush1.msra.mxu0 0.0
    %362 = vmatprep.subr.mxu0 0.0
    %363 = vmatpush1.msra.mxu0 0.0
    %364 = vmatprep.subr.mxu0 0.0
    %365 = vmatpush1.msra.mxu0 0.0
    %366 = vmatprep.subr.mxu0 0.0
    %367 = vmatpush1.msra.mxu0 0.0
    %368 = vmatprep.subr.mxu0 0.0
    %369 = vmatpush1.msra.mxu0 0.0
    %370 = vmatprep.subr.mxu0 0.0
    %371 = vmatpush1.msra.mxu0 0.0
    %372 = vmatprep.subr.mxu0 0.0
    %373 = vmatpush1.msra.mxu0 0.0
    %374 = vmatprep.mubr.f32.mxu0 0.0
    %375 = vmatmul.mubr.f32.gmra.mrb[0].mxu0 %v286
    %v376 = vpop.f32.mrb[0].mxu0
    %v377 = vadd.f32 %v308, %v376
    %v378 = vpop.f32.mrb[0].mxu0
    %379 = vdwg.mxu0
    %v380 = vmax.f32 %v377, 0.0
    %v381 = vadd.f32 %v286, %v380
    %s382 = scalar_lea.vmem [#allocation10], 128
    %v383 = vld [vmem:[%s382] sm:$0xff]
    %v384 = vld [vmem:[%s382 + $0x8] sm:$0xff]
    %v385 = vld [vmem:[%s382 + $0x10] sm:$0xff]
    %v386 = vld [vmem:[%s382 + $0x18] sm:$0xff]
    %v387 = vld [vmem:[%s382 + $0x20] sm:$0xff]
    %v388 = vld [vmem:[%s382 + $0x28] sm:$0xff]
    %v389 = vld [vmem:[%s382 + $0x30] sm:$0xff]
    %v390 = vld [vmem:[%s382 + $0x38] sm:$0xff]
    %v391 = vld [vmem:[%s382 + $0x40] sm:$0xff]
    %v392 = vld [vmem:[%s382 + $0x48] sm:$0xff]
    %v393 = vld [vmem:[%s382 + $0x50] sm:$0xff]
    %v394 = vld [vmem:[%s382 + $0x58] sm:$0xff]
    %v395 = vld [vmem:[%s382 + $0x60] sm:$0xff]
    %v396 = vld [vmem:[%s382 + $0x68] sm:$0xff]
    %v397 = vld [vmem:[%s382 + $0x70] sm:$0xff]
    %v398 = vld [vmem:[%s382 + $0x78] sm:$0xff]
    %s399 = scalar_lea.vmem %s6, 1
    %v400 = vld [vmem:[%s399] sm:$0x1]
    %v402 = vlaneseq
    %v403 = vshrl.u32 %v402, 7
    %v404 = vsub.s32 0, %v403
    %v405 = vrot.slane %v400, %v404
    %407 = vmatprep.subr.mxu0 0.0
    %408 = vmatpush1.msra.mxu0 %v383
    %409 = vmatprep.subr.mxu0 0.0
    %410 = vmatpush1.msra.mxu0 %v384
    %411 = vmatprep.subr.mxu0 0.0
    %412 = vmatpush1.msra.mxu0 %v385
    %413 = vmatprep.subr.mxu0 0.0
    %414 = vmatpush1.msra.mxu0 %v386
    %415 = vmatprep.subr.mxu0 0.0
    %416 = vmatpush1.msra.mxu0 %v387
    %417 = vmatprep.subr.mxu0 0.0
    %418 = vmatpush1.msra.mxu0 %v388
    %419 = vmatprep.subr.mxu0 0.0
    %420 = vmatpush1.msra.mxu0 %v389
    %421 = vmatprep.subr.mxu0 0.0
    %422 = vmatpush1.msra.mxu0 %v390
    %423 = vmatprep.subr.mxu0 0.0
    %424 = vmatpush1.msra.mxu0 %v391
    %425 = vmatprep.subr.mxu0 0.0
    %426 = vmatpush1.msra.mxu0 %v392
    %427 = vmatprep.subr.mxu0 0.0
    %428 = vmatpush1.msra.mxu0 %v393
    %429 = vmatprep.subr.mxu0 0.0
    %430 = vmatpush1.msra.mxu0 %v394
    %431 = vmatprep.subr.mxu0 0.0
    %432 = vmatpush1.msra.mxu0 %v395
    %433 = vmatprep.subr.mxu0 0.0
    %434 = vmatpush1.msra.mxu0 %v396
    %435 = vmatprep.subr.mxu0 0.0
    %436 = vmatpush1.msra.mxu0 %v397
    %437 = vmatprep.subr.mxu0 0.0
    %438 = vmatpush1.msra.mxu0 %v398
    %439 = vmatprep.subr.mxu0 0.0
    %440 = vmatpush1.msra.mxu0 0.0
    %441 = vmatprep.subr.mxu0 0.0
    %442 = vmatpush1.msra.mxu0 0.0
    %443 = vmatprep.subr.mxu0 0.0
    %444 = vmatpush1.msra.mxu0 0.0
    %445 = vmatprep.subr.mxu0 0.0
    %446 = vmatpush1.msra.mxu0 0.0
    %447 = vmatprep.subr.mxu0 0.0
    %448 = vmatpush1.msra.mxu0 0.0
    %449 = vmatprep.subr.mxu0 0.0
    %450 = vmatpush1.msra.mxu0 0.0
    %451 = vmatprep.subr.mxu0 0.0
    %452 = vmatpush1.msra.mxu0 0.0
    %453 = vmatprep.subr.mxu0 0.0
    %454 = vmatpush1.msra.mxu0 0.0
    %455 = vmatprep.subr.mxu0 0.0
    %456 = vmatpush1.msra.mxu0 0.0
    %457 = vmatprep.subr.mxu0 0.0
    %458 = vmatpush1.msra.mxu0 0.0
    %459 = vmatprep.subr.mxu0 0.0
    %460 = vmatpush1.msra.mxu0 0.0
    %461 = vmatprep.subr.mxu0 0.0
    %462 = vmatpush1.msra.mxu0 0.0
    %463 = vmatprep.subr.mxu0 0.0
    %464 = vmatpush1.msra.mxu0 0.0
    %465 = vmatprep.subr.mxu0 0.0
    %466 = vmatpush1.msra.mxu0 0.0
    %467 = vmatprep.subr.mxu0 0.0
    %468 = vmatpush1.msra.mxu0 0.0
    %469 = vmatprep.subr.mxu0 0.0
    %470 = vmatpush1.msra.mxu0 0.0
    %471 = vmatprep.mubr.f32.mxu0 0.0
    %472 = vmatmul.mubr.f32.gmra.mrb[0].mxu0 %v381
    %v473 = vpop.f32.mrb[0].mxu0
    %v474 = vadd.f32 %v405, %v473
    %v475 = vpop.f32.mrb[0].mxu0
    %476 = vdwg.mxu0
    %v477 = vmax.f32 %v474, 0.0
    %v478 = vadd.f32 %v381, %v477
    %s479 = scalar_lea.vmem [#allocation10], 256
    %v480 = vld [vmem:[%s479] sm:$0xff]
    %v481 = vld [vmem:[%s479 + $0x8] sm:$0xff]
    %v482 = vld [vmem:[%s479 + $0x10] sm:$0xff]
    %v483 = vld [vmem:[%s479 + $0x18] sm:$0xff]
    %v484 = vld [vmem:[%s479 + $0x20] sm:$0xff]
    %v485 = vld [vmem:[%s479 + $0x28] sm:$0xff]
    %v486 = vld [vmem:[%s479 + $0x30] sm:$0xff]
    %v487 = vld [vmem:[%s479 + $0x38] sm:$0xff]
    %v488 = vld [vmem:[%s479 + $0x40] sm:$0xff]
    %v489 = vld [vmem:[%s479 + $0x48] sm:$0xff]
    %v490 = vld [vmem:[%s479 + $0x50] sm:$0xff]
    %v491 = vld [vmem:[%s479 + $0x58] sm:$0xff]
    %v492 = vld [vmem:[%s479 + $0x60] sm:$0xff]
    %v493 = vld [vmem:[%s479 + $0x68] sm:$0xff]
    %v494 = vld [vmem:[%s479 + $0x70] sm:$0xff]
    %v495 = vld [vmem:[%s479 + $0x78] sm:$0xff]
    %s496 = scalar_lea.vmem %s6, 2
    %v497 = vld [vmem:[%s496] sm:$0x1]
    %v499 = vlaneseq
    %v500 = vshrl.u32 %v499, 7
    %v501 = vsub.s32 0, %v500
    %v502 = vrot.slane %v497, %v501
    %504 = vmatprep.subr.mxu0 0.0
    %505 = vmatpush1.msra.mxu0 %v480
    %506 = vmatprep.subr.mxu0 0.0
    %507 = vmatpush1.msra.mxu0 %v481
    %508 = vmatprep.subr.mxu0 0.0
    %509 = vmatpush1.msra.mxu0 %v482
    %510 = vmatprep.subr.mxu0 0.0
    %511 = vmatpush1.msra.mxu0 %v483
    %512 = vmatprep.subr.mxu0 0.0
    %513 = vmatpush1.msra.mxu0 %v484
    %514 = vmatprep.subr.mxu0 0.0
    %515 = vmatpush1.msra.mxu0 %v485
    %516 = vmatprep.subr.mxu0 0.0
    %517 = vmatpush1.msra.mxu0 %v486
    %518 = vmatprep.subr.mxu0 0.0
    %519 = vmatpush1.msra.mxu0 %v487
    %520 = vmatprep.subr.mxu0 0.0
    %521 = vmatpush1.msra.mxu0 %v488
    %522 = vmatprep.subr.mxu0 0.0
    %523 = vmatpush1.msra.mxu0 %v489
    %524 = vmatprep.subr.mxu0 0.0
    %525 = vmatpush1.msra.mxu0 %v490
    %526 = vmatprep.subr.mxu0 0.0
    %527 = vmatpush1.msra.mxu0 %v491
    %528 = vmatprep.subr.mxu0 0.0
    %529 = vmatpush1.msra.mxu0 %v492
    %530 = vmatprep.subr.mxu0 0.0
    %531 = vmatpush1.msra.mxu0 %v493
    %532 = vmatprep.subr.mxu0 0.0
    %533 = vmatpush1.msra.mxu0 %v494
    %534 = vmatprep.subr.mxu0 0.0
    %535 = vmatpush1.msra.mxu0 %v495
    %536 = vmatprep.subr.mxu0 0.0
    %537 = vmatpush1.msra.mxu0 0.0
    %538 = vmatprep.subr.mxu0 0.0
    %539 = vmatpush1.msra.mxu0 0.0
    %540 = vmatprep.subr.mxu0 0.0
    %541 = vmatpush1.msra.mxu0 0.0
    %542 = vmatprep.subr.mxu0 0.0
    %543 = vmatpush1.msra.mxu0 0.0
    %544 = vmatprep.subr.mxu0 0.0
    %545 = vmatpush1.msra.mxu0 0.0
    %546 = vmatprep.subr.mxu0 0.0
    %547 = vmatpush1.msra.mxu0 0.0
    %548 = vmatprep.subr.mxu0 0.0
    %549 = vmatpush1.msra.mxu0 0.0
    %550 = vmatprep.subr.mxu0 0.0
    %551 = vmatpush1.msra.mxu0 0.0
    %552 = vmatprep.subr.mxu0 0.0
    %553 = vmatpush1.msra.mxu0 0.0
    %554 = vmatprep.subr.mxu0 0.0
    %555 = vmatpush1.msra.mxu0 0.0
    %556 = vmatprep.subr.mxu0 0.0
    %557 = vmatpush1.msra.mxu0 0.0
    %558 = vmatprep.subr.mxu0 0.0
    %559 = vmatpush1.msra.mxu0 0.0
    %560 = vmatprep.subr.mxu0 0.0
    %561 = vmatpush1.msra.mxu0 0.0
    %562 = vmatprep.subr.mxu0 0.0
    %563 = vmatpush1.msra.mxu0 0.0
    %564 = vmatprep.subr.mxu0 0.0
    %565 = vmatpush1.msra.mxu0 0.0
    %566 = vmatprep.subr.mxu0 0.0
    %567 = vmatpush1.msra.mxu0 0.0
    %568 = vmatprep.mubr.f32.mxu0 0.0
    %569 = vmatmul.mubr.f32.gmra.mrb[0].mxu0 %v478
    %v570 = vpop.f32.mrb[0].mxu0
    %v571 = vadd.f32 %v502, %v570
    %v572 = vpop.f32.mrb[0].mxu0
    %573 = vdwg.mxu0
    %v574 = vmax.f32 %v571, 0.0
    %v575 = vadd.f32 %v478, %v574
    %s576 = scalar_lea.vmem [#allocation10], 384
    %v577 = vld [vmem:[%s576] sm:$0xff]
    %v578 = vld [vmem:[%s576 + $0x8] sm:$0xff]
    %v579 = vld [vmem:[%s576 + $0x10] sm:$0xff]
    %v580 = vld [vmem:[%s576 + $0x18] sm:$0xff]
    %v581 = vld [vmem:[%s576 + $0x20] sm:$0xff]
    %v582 = vld [vmem:[%s576 + $0x28] sm:$0xff]
    %v583 = vld [vmem:[%s576 + $0x30] sm:$0xff]
    %v584 = vld [vmem:[%s576 + $0x38] sm:$0xff]
    %v585 = vld [vmem:[%s576 + $0x40] sm:$0xff]
    %v586 = vld [vmem:[%s576 + $0x48] sm:$0xff]
    %v587 = vld [vmem:[%s576 + $0x50] sm:$0xff]
    %v588 = vld [vmem:[%s576 + $0x58] sm:$0xff]
    %v589 = vld [vmem:[%s576 + $0x60] sm:$0xff]
    %v590 = vld [vmem:[%s576 + $0x68] sm:$0xff]
    %v591 = vld [vmem:[%s576 + $0x70] sm:$0xff]
    %v592 = vld [vmem:[%s576 + $0x78] sm:$0xff]
    %s593 = scalar_lea.vmem %s6, 3
    %v594 = vld [vmem:[%s593] sm:$0x1]
    %v596 = vlaneseq
    %v597 = vshrl.u32 %v596, 7
    %v598 = vsub.s32 0, %v597
    %v599 = vrot.slane %v594, %v598
    %601 = vmatprep.subr.mxu0 0.0
    %602 = vmatpush1.msra.mxu0 %v577
    %603 = vmatprep.subr.mxu0 0.0
    %604 = vmatpush1.msra.mxu0 %v578
    %605 = vmatprep.subr.mxu0 0.0
    %606 = vmatpush1.msra.mxu0 %v579
    %607 = vmatprep.subr.mxu0 0.0
    %608 = vmatpush1.msra.mxu0 %v580
    %609 = vmatprep.subr.mxu0 0.0
    %610 = vmatpush1.msra.mxu0 %v581
    %611 = vmatprep.subr.mxu0 0.0
    %612 = vmatpush1.msra.mxu0 %v582
    %613 = vmatprep.subr.mxu0 0.0
    %614 = vmatpush1.msra.mxu0 %v583
    %615 = vmatprep.subr.mxu0 0.0
    %616 = vmatpush1.msra.mxu0 %v584
    %617 = vmatprep.subr.mxu0 0.0
    %618 = vmatpush1.msra.mxu0 %v585
    %619 = vmatprep.subr.mxu0 0.0
    %620 = vmatpush1.msra.mxu0 %v586
    %621 = vmatprep.subr.mxu0 0.0
    %622 = vmatpush1.msra.mxu0 %v587
    %623 = vmatprep.subr.mxu0 0.0
    %624 = vmatpush1.msra.mxu0 %v588
    %625 = vmatprep.subr.mxu0 0.0
    %626 = vmatpush1.msra.mxu0 %v589
    %627 = vmatprep.subr.mxu0 0.0
    %628 = vmatpush1.msra.mxu0 %v590
    %629 = vmatprep.subr.mxu0 0.0
    %630 = vmatpush1.msra.mxu0 %v591
    %631 = vmatprep.subr.mxu0 0.0
    %632 = vmatpush1.msra.mxu0 %v592
    %633 = vmatprep.subr.mxu0 0.0
    %634 = vmatpush1.msra.mxu0 0.0
    %635 = vmatprep.subr.mxu0 0.0
    %636 = vmatpush1.msra.mxu0 0.0
    %637 = vmatprep.subr.mxu0 0.0
    %638 = vmatpush1.msra.mxu0 0.0
    %639 = vmatprep.subr.mxu0 0.0
    %640 = vmatpush1.msra.mxu0 0.0
    %641 = vmatprep.subr.mxu0 0.0
    %642 = vmatpush1.msra.mxu0 0.0
    %643 = vmatprep.subr.mxu0 0.0
    %644 = vmatpush1.msra.mxu0 0.0
    %645 = vmatprep.subr.mxu0 0.0
    %646 = vmatpush1.msra.mxu0 0.0
    %647 = vmatprep.subr.mxu0 0.0
    %648 = vmatpush1.msra.mxu0 0.0
    %649 = vmatprep.subr.mxu0 0.0
    %650 = vmatpush1.msra.mxu0 0.0
    %651 = vmatprep.subr.mxu0 0.0
    %652 = vmatpush1.msra.mxu0 0.0
    %653 = vmatprep.subr.mxu0 0.0
    %654 = vmatpush1.msra.mxu0 0.0
    %655 = vmatprep.subr.mxu0 0.0
    %656 = vmatpush1.msra.mxu0 0.0
    %657 = vmatprep.subr.mxu0 0.0
    %658 = vmatpush1.msra.mxu0 0.0
    %659 = vmatprep.subr.mxu0 0.0
    %660 = vmatpush1.msra.mxu0 0.0
    %661 = vmatprep.subr.mxu0 0.0
    %662 = vmatpush1.msra.mxu0 0.0
    %663 = vmatprep.subr.mxu0 0.0
    %664 = vmatpush1.msra.mxu0 0.0
    %665 = vmatprep.mubr.f32.mxu0 0.0
    %666 = vmatmul.mubr.f32.gmra.mrb[0].mxu0 %v575
    %v667 = vpop.f32.mrb[0].mxu0
    %v668 = vadd.f32 %v599, %v667
    %v669 = vpop.f32.mrb[0].mxu0
    %670 = vdwg.mxu0
    %v671 = vmax.f32 %v668, 0.0
    %v672 = vtanh.pop %v671
    %v673 = vld [vmem:[#allocation11] sm:$0xff]
    %v674 = vld [vmem:[#allocation11 + $0x8] sm:$0xff]
    %v675 = vld [vmem:[#allocation11 + $0x10] sm:$0xff]
    %v676 = vld [vmem:[#allocation11 + $0x18] sm:$0xff]
    %v677 = vld [vmem:[#allocation11 + $0x20] sm:$0xff]
    %v678 = vld [vmem:[#allocation11 + $0x28] sm:$0xff]
    %v679 = vld [vmem:[#allocation11 + $0x30] sm:$0xff]
    %v680 = vld [vmem:[#allocation11 + $0x38] sm:$0xff]
    %v681 = vld [vmem:[#allocation11 + $0x40] sm:$0xff]
    %v682 = vld [vmem:[#allocation11 + $0x48] sm:$0xff]
    %v683 = vld [vmem:[#allocation11 + $0x50] sm:$0xff]
    %v684 = vld [vmem:[#allocation11 + $0x58] sm:$0xff]
    %v685 = vld [vmem:[#allocation11 + $0x60] sm:$0xff]
    %v686 = vld [vmem:[#allocation11 + $0x68] sm:$0xff]
    %v687 = vld [vmem:[#allocation11 + $0x70] sm:$0xff]
    %v688 = vld [vmem:[#allocation11 + $0x78] sm:$0xff]
    %v689 = vld [vmem:[%s8] sm:$0x1]
    %v691 = vlaneseq
    %v692 = vshrl.u32 %v691, 7
    %v693 = vsub.s32 0, %v692
    %v694 = vrot.slane %v689, %v693
    %696 = vmatprep.subr.mxu0 0.0
    %697 = vmatpush1.msra.mxu0 %v673
    %698 = vmatprep.subr.mxu0 0.0
    %699 = vmatpush1.msra.mxu0 %v674
    %700 = vmatprep.subr.mxu0 0.0
    %701 = vmatpush1.msra.mxu0 %v675
    %702 = vmatprep.subr.mxu0 0.0
    %703 = vmatpush1.msra.mxu0 %v676
    %704 = vmatprep.subr.mxu0 0.0
    %705 = vmatpush1.msra.mxu0 %v677
    %706 = vmatprep.subr.mxu0 0.0
    %707 = vmatpush1.msra.mxu0 %v678
    %708 = vmatprep.subr.mxu0 0.0
    %709 = vmatpush1.msra.mxu0 %v679
    %710 = vmatprep.subr.mxu0 0.0
    %711 = vmatpush1.msra.mxu0 %v680
    %712 = vmatprep.subr.mxu0 0.0
    %713 = vmatpush1.msra.mxu0 %v681
    %714 = vmatprep.subr.mxu0 0.0
    %715 = vmatpush1.msra.mxu0 %v682
    %716 = vmatprep.subr.mxu0 0.0
    %717 = vmatpush1.msra.mxu0 %v683
    %718 = vmatprep.subr.mxu0 0.0
    %719 = vmatpush1.msra.mxu0 %v684
    %720 = vmatprep.subr.mxu0 0.0
    %721 = vmatpush1.msra.mxu0 %v685
    %722 = vmatprep.subr.mxu0 0.0
    %723 = vmatpush1.msra.mxu0 %v686
    %724 = vmatprep.subr.mxu0 0.0
    %725 = vmatpush1.msra.mxu0 %v687
    %726 = vmatprep.subr.mxu0 0.0
    %727 = vmatpush1.msra.mxu0 %v688
    %728 = vmatprep.subr.mxu0 0.0
    %729 = vmatpush1.msra.mxu0 0.0
    %730 = vmatprep.subr.mxu0 0.0
    %731 = vmatpush1.msra.mxu0 0.0
    %732 = vmatprep.subr.mxu0 0.0
    %733 = vmatpush1.msra.mxu0 0.0
    %734 = vmatprep.subr.mxu0 0.0
    %735 = vmatpush1.msra.mxu0 0.0
    %736 = vmatprep.subr.mxu0 0.0
    %737 = vmatpush1.msra.mxu0 0.0
    %738 = vmatprep.subr.mxu0 0.0
    %739 = vmatpush1.msra.mxu0 0.0
    %740 = vmatprep.subr.mxu0 0.0
    %741 = vmatpush1.msra.mxu0 0.0
    %742 = vmatprep.subr.mxu0 0.0
    %743 = vmatpush1.msra.mxu0 0.0
    %744 = vmatprep.subr.mxu0 0.0
    %745 = vmatpush1.msra.mxu0 0.0
    %746 = vmatprep.subr.mxu0 0.0
    %747 = vmatpush1.msra.mxu0 0.0
    %748 = vmatprep.subr.mxu0 0.0
    %749 = vmatpush1.msra.mxu0 0.0
    %750 = vmatprep.subr.mxu0 0.0
    %751 = vmatpush1.msra.mxu0 0.0
    %752 = vmatprep.subr.mxu0 0.0
    %753 = vmatpush1.msra.mxu0 0.0
    %754 = vmatprep.subr.mxu0 0.0
    %755 = vmatpush1.msra.mxu0 0.0
    %756 = vmatprep.subr.mxu0 0.0
    %757 = vmatpush1.msra.mxu0 0.0
    %758 = vmatprep.subr.mxu0 0.0
    %759 = vmatpush1.msra.mxu0 0.0
    %760 = vmatprep.mubr.f32.mxu0 0.0
    %761 = vmatmul.mubr.f32.gmra.mrb[0].mxu0 %v672
    %v762 = vpop.f32.mrb[0].mxu0
    %v763 = vadd.f32 %v694, %v762
    %v764 = vpop.f32.mrb[0].mxu0
    %765 = vdwg.mxu0
    %766 = vst [vmem:[#allocation13] sm:$0xff] %v763
    // Predicated region
    $region62: #{tpu_custom_call.1} parent=1 // pred_check
      _
    $region63: #{tpu_custom_call.1} parent=1 // pred_check_branch
      %768 = sbr.rel (0) target = $region65
    $region64: #{tpu_custom_call.1} parent=1 // pred_region
      %s770 = ssub.s32 128, 128
      %771 = vsyncadd [#allocation4], %s770
      %s773 = sshll.u32 [#allocation13], 4
      %s774 = int_to_ptr.vmem [resolvable:$true] %s773
      %776 = dma.vmem_to_hbm [thread:$0]  %s774, 128, %s9, [#allocation4]
    $region65: #{tpu_custom_call.1} parent=1 // pred_fallthru
      _
    // Predicated region
    $region66: #{tpu_custom_call.1} parent=1 // pred_check
      _
    $region67: #{tpu_custom_call.1} parent=1 // pred_check_branch
      %778 = sbr.rel (0) target = $region69
    $region68: #{tpu_custom_call.1} parent=1 // pred_region
      %779 = dma.done [#allocation4], 128
    $region69: #{tpu_custom_call.1} parent=1 // pred_fallthru
      _
    %780 = vsyncpa [#allocation3], 1
    %781 = vsyncpa [#allocation6], 1
    %782 = vsyncpa [#allocation9], 1
    %783 = vsyncpa [#allocation12], 1
    %784 = vsyncpa [#allocation4], 1

</llo_original>
